<compile_context>
chip_gen: v6e
topology: v6e:2x2x1
jax: 0.10.0
libtpu: 0.0.40
codegen_flags: <defaults>
</compile_context>

<pallas_src>
import jax
import jax.numpy as jnp
from jax.experimental import pallas as pl
from jax.experimental.pallas import tpu as pltpu

EPS = 1e-5


def _layernorm_kernel(gamma_ref, beta_ref, x_ref, o_ref):
    # x_ref block: (TS, D) -- normalize over the last (lane) axis.
    x = x_ref[...].astype(jnp.float32)
    d = x.shape[-1]

    mean = jnp.mean(x, axis=-1, keepdims=True)          # (TS, 1)
    xc = x - mean                                       # single full-tile pass
    # torch.std uses the unbiased estimator (ddof = 1).
    var = jnp.sum(xc * xc, axis=-1, keepdims=True) / (d - 1)
    std = jnp.sqrt(var)

    # Reciprocal on the (TS, 1) column only; keep exact (approx=False) so the
    # 1e-5 tolerance against the reference holds. Fold gamma in so the final
    # write is one fused multiply-add over the tile.
    inv = pl.reciprocal(std + EPS, approx=False)
    g = gamma_ref[0]
    b = beta_ref[0]
    scale = g * inv                                     # (TS, 1)
    o_ref[...] = (xc * scale + b).astype(o_ref.dtype)


def _pick_row_tile(rows, d, itemsize, target_bytes=2 * 1024 * 1024):
    """Rows per block: ~2 MiB, multiple of 8, or the full row count."""
    if rows <= 8:
        return rows
    bytes_per_row = max(d * itemsize, 1)
    ts = target_bytes // bytes_per_row
    ts = int(min(rows, max(8, ts)))
    ts = (ts // 8) * 8
    if ts <= 0 or ts >= rows:
        return rows
    return ts


def encoder_forward(x, mask, gamma, beta, layers=()):
    """Encoder.forward: apply layers (none here), then LayerNormalization via Pallas."""
    # layers would be applied here; ModuleList is empty in this synthetic setup.
    for layer in layers:
        x = layer(x, mask)

    B, S, D = x.shape
    rows = B * S
    x2d = x.reshape(rows, D)

    ts = _pick_row_tile(rows, D, x.dtype.itemsize)
    num_tiles = pl.cdiv(rows, ts)

    cost = pl.CostEstimate(
        flops=5 * rows * D,
        transcendentals=2 * rows,                        # sqrt + reciprocal per row
        bytes_accessed=2 * rows * D * x.dtype.itemsize,
    )

    out2d = pl.pallas_call(
        _layernorm_kernel,
        out_shape=jax.ShapeDtypeStruct((rows, D), x.dtype),
        grid_spec=pltpu.PrefetchScalarGridSpec(
            num_scalar_prefetch=0,
            grid=(num_tiles,),
            in_specs=[
                pl.BlockSpec(memory_space=pltpu.SMEM),        # gamma (1,)
                pl.BlockSpec(memory_space=pltpu.SMEM),        # beta  (1,)
                pl.BlockSpec((ts, D), lambda i: (i, 0)),      # x row-tile
            ],
            out_specs=pl.BlockSpec((ts, D), lambda i: (i, 0)),
        ),
        compiler_params=pltpu.CompilerParams(
            dimension_semantics=("parallel",),
            vmem_limit_bytes=32 * 1024 * 1024,                # safe on v5e/v6e/v7x
        ),
        cost_estimate=cost,
    )(gamma, beta, x2d)

    return out2d.reshape(B, S, D)


def _reference(x, gamma, beta):
    x = x.astype(jnp.float32)
    mean = jnp.mean(x, axis=-1, keepdims=True)
    std = jnp.std(x, axis=-1, keepdims=True, ddof=1)
    return gamma[0] * (x - mean) / (std + EPS) + beta[0]


if __name__ == "__main__":
    key = jax.random.PRNGKey(0)
    B, S, D = 2, 8, 32

    kx, _ = jax.random.split(key)
    x = jax.random.normal(kx, (B, S, D), dtype=jnp.float32)
    # Attention mask (unused by the empty layer stack, kept for signature parity).
    mask = jnp.ones((B, 1, S, S), dtype=jnp.float32)

    # Deterministic parameter init matching nn.Parameter(torch.ones(1)/zeros(1)).
    gamma = jnp.ones((1,), dtype=jnp.float32)
    beta = jnp.zeros((1,), dtype=jnp.float32)

    out = encoder_forward(x, mask, gamma, beta)
    out = jax.block_until_ready(out)

    ref = _reference(x, gamma, beta)
    assert out.shape == (B, S, D)
    assert jnp.allclose(out, ref, atol=1e-5, rtol=1e-5)

    print("KERNEL_OK")
</pallas_src>

<mosaic_0001>
module attributes {stable_mosaic.version = 11 : i64} {
  func.func @_layernorm_kernel(%arg0: i32, %arg1: memref<1xf32, #tpu.memory_space<smem>>, %arg2: memref<1xf32, #tpu.memory_space<smem>>, %arg3: memref<16x32xf32, #tpu.memory_space<vmem>>, %arg4: memref<16x32xf32, #tpu.memory_space<vmem>>) attributes {dimension_semantics = [#tpu.dimension_semantics<parallel>], iteration_bounds = array<i64: 1>, scalar_prefetch = 0 : i64, scratch_operands = 0 : i64, tpu.core_type = #tpu.core_type<tc>, window_params = [{transform_indices = @transform_0, window_bounds = array<i64: 1>}, {transform_indices = @transform_1, window_bounds = array<i64: 1>}, {transform_indices = @transform_2, window_bounds = array<i64: 16, 32>}, {transform_indices = @transform_3, window_bounds = array<i64: 16, 32>}]} {
    %c0 = arith.constant 0 : index
    %c0_0 = arith.constant 0 : index
    %0 = vector.load %arg3[%c0, %c0_0] : memref<16x32xf32, #tpu.memory_space<vmem>>, vector<16x32xf32>
    %cst = arith.constant dense<0.000000e+00> : vector<16xf32>
    %1 = vector.multi_reduction <add>, %0, %cst [1] : vector<16x32xf32> to vector<16xf32>
    %2 = vector.shape_cast %1 : vector<16xf32> to vector<16x1xf32>
    %cst_1 = arith.constant 3.200000e+01 : f32
    %3 = vector.broadcast %cst_1 : f32 to vector<16x1xf32>
    %4 = arith.divf %2, %3 : vector<16x1xf32>
    %5 = vector.broadcast %4 : vector<16x1xf32> to vector<16x32xf32>
    %6 = arith.subf %0, %5 : vector<16x32xf32>
    %7 = arith.mulf %6, %6 : vector<16x32xf32>
    %cst_2 = arith.constant dense<0.000000e+00> : vector<16xf32>
    %8 = vector.multi_reduction <add>, %7, %cst_2 [1] : vector<16x32xf32> to vector<16xf32>
    %9 = vector.shape_cast %8 : vector<16xf32> to vector<16x1xf32>
    %cst_3 = arith.constant 3.100000e+01 : f32
    %10 = vector.broadcast %cst_3 : f32 to vector<16x1xf32>
    %11 = arith.divf %9, %10 : vector<16x1xf32>
    %12 = math.sqrt %11 : vector<16x1xf32>
    %cst_4 = arith.constant 9.99999974E-6 : f32
    %13 = vector.broadcast %cst_4 : f32 to vector<16x1xf32>
    %14 = arith.addf %12, %13 : vector<16x1xf32>
    %15 = tpu.reciprocal %14 : vector<16x1xf32> -> vector<16x1xf32>
    %c0_5 = arith.constant 0 : index
    %16 = memref.load %arg1[%c0_5] : memref<1xf32, #tpu.memory_space<smem>>
    %c0_6 = arith.constant 0 : index
    %17 = memref.load %arg2[%c0_6] : memref<1xf32, #tpu.memory_space<smem>>
    %18 = vector.broadcast %16 : f32 to vector<16x1xf32>
    %19 = arith.mulf %18, %15 : vector<16x1xf32>
    %20 = vector.broadcast %19 : vector<16x1xf32> to vector<16x32xf32>
    %21 = arith.mulf %6, %20 : vector<16x32xf32>
    %22 = vector.broadcast %17 : f32 to vector<16x32xf32>
    %23 = arith.addf %21, %22 : vector<16x32xf32>
    %c0_7 = arith.constant 0 : index
    %c0_8 = arith.constant 0 : index
    %24 = vector.load %arg4[%c0_7, %c0_8] : memref<16x32xf32, #tpu.memory_space<vmem>>, vector<16x32xf32>
    tpu.vector_store %arg4[%c0_7, %c0_8], %23 {strides = array<i32>} : memref<16x32xf32, #tpu.memory_space<vmem>>, vector<16x32xf32>,
    return
  }
  func.func @transform_0(%arg0: i32) -> i32 {
    %c0_i32 = arith.constant 0 : i32
    %c0_i32_0 = arith.constant 0 : i32
    return %c0_i32 : i32
  }
  func.func @transform_1(%arg0: i32) -> i32 {
    %c0_i32 = arith.constant 0 : i32
    %c0_i32_0 = arith.constant 0 : i32
    return %c0_i32 : i32
  }
  func.func @transform_2(%arg0: i32) -> (i32, i32) {
    %c0_i32 = arith.constant 0 : i32
    %c0_i32_0 = arith.constant 0 : i32
    return %arg0, %c0_i32 : i32, i32
  }
  func.func @transform_3(%arg0: i32) -> (i32, i32) {
    %c0_i32 = arith.constant 0 : i32
    %c0_i32_0 = arith.constant 0 : i32
    return %arg0, %c0_i32 : i32, i32
  }
}

</mosaic_0001>

<llo_original>
// kernel: tpu_custom_call.1
$region0: #{tpu_custom_call.1}
  #allocation0 [shape = 'u32[]', space=smem, size = 0x4, offset = 0x4, fixed_abs, tag = 'smem constant byte address 0x4 - core index']
  #allocation1 [shape = 'u32[144,128]{1,0:T(1,128)}', space=vmem, size = 0x12000, scoped, tag = 'internal scratch']
  #allocation2 [shape = 'f32[1]{0:T(128)S(6)}', space=smem, size = 0x200, scoped, tag = 'scoped memory for tpu_custom_call.1']
  #allocation3 [shape = 'f32[1]{0:T(128)S(6)}', space=smem, size = 0x200, scoped, tag = 'scoped memory for tpu_custom_call.1']
  %s0 = inlined_call_operand.<no memory space> [shape: f32[1], index: 0, kind: input, shape index: {}]
  %s1 = inlined_call_operand.<no memory space> [shape: f32[1], index: 1, kind: input, shape index: {}]
  %s2 = inlined_call_operand.hbm [shape: f32[16,32], index: 2, kind: input, shape index: {}]
  %s3 = inlined_call_operand.hbm [shape: f32[16,32], index: 3, kind: output, shape index: {}]
  %s4 = sld [smem:[#allocation0]]
  $region26: #{tpu_custom_call.1} parent=0
    _
  %s6 = ssub.s32 1, %s4
  %s7 = scalar_select 0, %s6, %s4
  %8 = sst [smem:[#allocation2]] %s0
  %9 = sst [smem:[#allocation3]] %s1
  $region1: #{tpu_custom_call.1} parent=0
    #allocation4 [shape = 'u8[8192]{0}', space=vmem, size = 0x2000, scoped, tag = 'input window, operand 2, single buffered']
    #allocation5 [shape = 's32[1]{0}', space=sflag, size = 0x4, scoped, tag = 'scoped memory for tpu_custom_call.1']
    #allocation6 [shape = 's32[1]{0}', space=sflag, size = 0x4, scoped, tag = 'scoped memory for tpu_custom_call.1']
    #allocation7 [shape = 'u8[8192]{0}', space=vmem, size = 0x2000, scoped, tag = 'output window, operand 0, single buffered']
    %10 = vsyncpa [#allocation5], 0
    %11 = vsyncpa [#allocation6], 0
    // Predicated region
    $region2: #{tpu_custom_call.1} parent=1 // pred_check
      _
    $region3: #{tpu_custom_call.1} parent=1 // pred_check_branch
      %13 = sbr.rel (0) target = $region5
    $region4: #{tpu_custom_call.1} parent=1 // pred_region
      _
    $region5: #{tpu_custom_call.1} parent=1 // pred_fallthru
      _
    // Predicated region
    $region6: #{tpu_custom_call.1} parent=1 // pred_check
      _
    $region7: #{tpu_custom_call.1} parent=1 // pred_check_branch
      %15 = sbr.rel (0) target = $region9
    $region8: #{tpu_custom_call.1} parent=1 // pred_region
      _
    $region9: #{tpu_custom_call.1} parent=1 // pred_fallthru
      _
    // Predicated region
    $region10: #{tpu_custom_call.1} parent=1 // pred_check
      _
    $region11: #{tpu_custom_call.1} parent=1 // pred_check_branch
      %17 = sbr.rel (0) target = $region13
    $region12: #{tpu_custom_call.1} parent=1 // pred_region
      %s19 = ssub.s32 256, 256
      %20 = vsyncadd [#allocation5], %s19
      %s21 = sshll.u32 [#allocation4], 4
      %s22 = int_to_ptr.vmem [resolvable:$true] %s21
      %27 = dma.hbm_to_vmem [thread:$0]  %s2, 256, %s22, [#allocation5], 128, 128, 8
    $region13: #{tpu_custom_call.1} parent=1 // pred_fallthru
      _
    // Predicated region
    $region14: #{tpu_custom_call.1} parent=1 // pred_check
      _
    $region15: #{tpu_custom_call.1} parent=1 // pred_check_branch
      %29 = sbr.rel (0) target = $region17
    $region16: #{tpu_custom_call.1} parent=1 // pred_region
      %30 = dma.done [#allocation5], 256
    $region17: #{tpu_custom_call.1} parent=1 // pred_fallthru
      _
    %v31 = vld [vmem:[#allocation4] sm:$0xff]
    %v32 = vld [vmem:[#allocation4 + $0x8] sm:$0xff]
    %vm33 = vcmask 261120
    %v34 = vsel %vm33, %v31, 0.0
    %35 = vadd.xlane.f32.xlu0 %v34
    %v36 = vpop.xlane.xlu0 %35
    %v37 = vsel %vm33, %v32, 0.0
    %38 = vadd.xlane.f32.xlu0 %v37
    %v39 = vpop.xlane.xlu0 %38
    %v40 = vrcp.pop 32.0
    %v41 = vmul.f32 %v36, %v40
    %v42 = vmul.f32 %v39, %v40
    %v43 = vsub.f32 %v31, %v41
    %v44 = vsub.f32 %v32, %v42
    %v45 = vmul.f32 %v43, %v43
    %v46 = vmul.f32 %v44, %v44
    %v47 = vsel %vm33, %v45, 0.0
    %48 = vadd.xlane.f32.xlu0 %v47
    %v49 = vpop.xlane.xlu0 %48
    %v50 = vsel %vm33, %v46, 0.0
    %51 = vadd.xlane.f32.xlu0 %v50
    %v52 = vpop.xlane.xlu0 %51
    %v53 = vrcp.pop 31.0
    %v54 = vmul.f32 %v49, %v53
    %v55 = vmul.f32 %v52, %v53
    %v56 = vrsqrt.pop %v54
    %v57 = vmul.f32 %v54, %v56
    %vm58 = vcmp.eq.f32.partialorder %v54, inf
    %v59 = vsel %vm58, %v54, %v57
    %vm60 = vcmp.eq.f32.partialorder %v54, 0.0
    %v61 = vand.u32 %v54, 2147483648
    %v62 = vsel %vm60, %v61, %v59
    %v63 = vrsqrt.pop %v55
    %v64 = vmul.f32 %v55, %v63
    %vm65 = vcmp.eq.f32.partialorder %v55, inf
    %v66 = vsel %vm65, %v55, %v64
    %vm67 = vcmp.eq.f32.partialorder %v55, 0.0
    %v68 = vand.u32 %v55, 2147483648
    %v69 = vsel %vm67, %v68, %v66
    %v70 = vadd.f32 %v62, 1e-05
    %v71 = vadd.f32 %v69, 1e-05
    %v72 = vrcp.pop %v70
    %v73 = vrcp.pop %v71
    %s74 = sld [smem:[#allocation2]]
    %s75 = sld [smem:[#allocation3]]
    %v76 = vstv %s74
    %v77 = vmul.f32 %v76, %v72
    %v78 = vmul.f32 %v76, %v73
    %v79 = vmul.f32 %v43, %v77
    %v80 = vmul.f32 %v44, %v78
    %v81 = vstv %s75
    %v82 = vadd.f32 %v79, %v81
    %v83 = vadd.f32 %v80, %v81
    %84 = vst.msk [vmem:[#allocation7] sm:$0xff] %vm33, %v82
    %85 = vst.msk [vmem:[#allocation7 + $0x8] sm:$0xff] %vm33, %v83
    // Predicated region
    $region18: #{tpu_custom_call.1} parent=1 // pred_check
      _
    $region19: #{tpu_custom_call.1} parent=1 // pred_check_branch
      %87 = sbr.rel (0) target = $region21
    $region20: #{tpu_custom_call.1} parent=1 // pred_region
      %s89 = ssub.s32 256, 256
      %90 = vsyncadd [#allocation6], %s89
      %s91 = sshll.u32 [#allocation7], 4
      %s92 = int_to_ptr.vmem [resolvable:$true] %s91
      %97 = dma.vmem_to_hbm [thread:$0]  %s92, 256, %s3, [#allocation6], 128, 128, 8
    $region21: #{tpu_custom_call.1} parent=1 // pred_fallthru
      _
    // Predicated region
    $region22: #{tpu_custom_call.1} parent=1 // pred_check
      _
    $region23: #{tpu_custom_call.1} parent=1 // pred_check_branch
      %99 = sbr.rel (0) target = $region25
    $region24: #{tpu_custom_call.1} parent=1 // pred_region
      %100 = dma.done [#allocation6], 256
    $region25: #{tpu_custom_call.1} parent=1 // pred_fallthru
      _
    %101 = vsyncpa [#allocation5], 1
    %102 = vsyncpa [#allocation6], 1

</llo_original>
